<compile_context>
chip_gen: v7x
topology: tpu7x:2x2x1
jax: 0.10.0
libtpu: 0.0.40
codegen_flags: <defaults>
</compile_context>

<pallas_src>
import functools

import jax
import jax.numpy as jnp
from jax import lax
from jax.experimental import pallas as pl
from jax.experimental.pallas import tpu as pltpu


# ----------------------------------------------------------------------------
# Fused Pallas kernel: conv-as-matmul (bias folded) + GLU(b1) + GLU(b2) + gate
# ----------------------------------------------------------------------------
def make_fused_kernel(dim_out, approx_sigmoid):
    half = dim_out // 2  # per-branch GLU half in pre-pixel-shuffle channel space

    def _sigmoid(x):
        if approx_sigmoid:
            # EUP exp + EUP approx reciprocal -> keeps the divide off the VPU.
            return pl.reciprocal(1.0 + jnp.exp(-x), approx=True)
        return jax.nn.sigmoid(x)

    def kernel(w_ref, p_ref, o_ref):
        # w_ref: (2*dim_out, K*K*Cin + 1)  stacked equivalent-conv weights + bias column
        # p_ref: (K*K*Cin + 1, Lt)         im2col patches + ones row, batch folded in lanes
        # o_ref: (dim_out//2, Lt)          gated output, pre-pixel-shuffle coordinates
        acc = jnp.dot(w_ref[...], p_ref[...],
                      preferred_element_type=jnp.float32)            # (2*dim_out, Lt) f32
        g1 = acc[:half] * _sigmoid(acc[half:2 * half])                # GLU, branch 1
        g2 = acc[2 * half:3 * half] * _sigmoid(acc[3 * half:])        # GLU, branch 2
        o_ref[...] = (g1 * _sigmoid(g2)).astype(o_ref.dtype)          # final gate

    return kernel


def _pick_block_nl(NL, cap=16384):
    """Tile size along the fused N*L lane axis.
    - ragged (not /128): one full block.
    - small:  one max-size tile, unless splitting in 2 keeps >=256 lanes/tile
              (feeds v7x's two TensorCores without over-splitting).
    - large:  largest multiple-of-128 divisor <= cap."""
    if NL % 128 != 0:
        return NL
    if NL <= cap:
        if NL % 256 == 0 and NL // 2 >= 256:
            return NL // 2
        return NL
    best, m = 128, 128
    while m <= cap:
        if NL % m == 0:
            best = m
        m += 128
    return best


def fused_conv_glu_gate(w_mat, patches, dim_out, out_dtype, approx_sigmoid):
    """w_mat: (2*dim_out, K*K*Cin+1); patches: (K*K*Cin+1, N*L).
    Returns gated output in pre-pixel-shuffle layout: (dim_out//2, N*L)."""
    Ct, KKC1 = w_mat.shape
    _, NL = patches.shape
    Cp = dim_out // 2
    block_nl = _pick_block_nl(NL)
    grid = (NL // block_nl,)

    return pl.pallas_call(
        make_fused_kernel(dim_out, approx_sigmoid),
        out_shape=jax.ShapeDtypeStruct((Cp, NL), out_dtype),
        grid=grid,
        in_specs=[
            pl.BlockSpec((Ct, KKC1), lambda t: (0, 0)),            # weights+bias (resident)
            pl.BlockSpec((KKC1, block_nl), lambda t: (0, t)),      # patches tile (lane-dense)
        ],
        out_specs=pl.BlockSpec((Cp, block_nl), lambda t: (0, t)),
        compiler_params=pltpu.CompilerParams(
            dimension_semantics=("parallel",),
            vmem_limit_bytes=32 * 1024 * 1024,
        ),
    )(w_mat, patches)


# ----------------------------------------------------------------------------
# UpSampleBlock forward (NCHW in -> NCHW out)
# ----------------------------------------------------------------------------
def upsample_block_forward(x, w1, b1, w2, b2, stride, padding,
                           mxu_dtype=jnp.bfloat16, out_dtype=jnp.float32):
    """x: (N, Cin, H, W); w*: (Cin, dim_out, K, K) PyTorch ConvTranspose2d layout."""
    N, Cin, H, W = x.shape
    K = w1.shape[2]
    dim_out = w1.shape[1]
    assert padding <= K - 1, "only padding <= kernel_size-1 supported (no output_padding)"
    assert dim_out % 16 == 0, ("PixelShuffle(2)+GLU needs dim_out % 8 == 0; dim_out % 16 "
                               "== 0 keeps GLU slices sublane-aligned in the kernel")

    # Cast BEFORE zero-insert / pad / im2col so the 9x patches array is built in MXU dtype.
    x = x.astype(mxu_dtype)

    # --- ConvTranspose2d as a regular conv: zero-insert (stride), pad, flip weights ---
    if stride > 1:
        # TODO(synk): phase-decompose stride>1 into stride^2 sub-convolutions instead of
        # zero-insertion (saves ~stride^2 conv FLOPs and one HBM pass of the dilated x).
        xd = jnp.zeros((N, Cin, (H - 1) * stride + 1, (W - 1) * stride + 1), mxu_dtype)
        xd = xd.at[:, :, ::stride, ::stride].set(x)
    else:
        xd = x
    pad = K - 1 - padding
    x_pad = jnp.pad(xd, ((0, 0), (0, 0), (pad, pad), (pad, pad)))
    Hp, Wp = x_pad.shape[2], x_pad.shape[3]
    Ho, Wo = Hp - K + 1, Wp - K + 1
    L = Ho * Wo
    NL = N * L

    # --- im2col with batch folded into the lane axis: (K*K*Cin + 1, N*L) ---
    x_cm = jnp.transpose(x_pad, (1, 0, 2, 3))                    # (Cin, N, Hp, Wp)
    cols = []
    for kh in range(K):
        for kw in range(K):
            cols.append(x_cm[:, :, kh:kh + Ho, kw:kw + Wo].reshape(Cin, NL))
    cols.append(jnp.ones((1, NL), mxu_dtype))                    # ones row -> bias fold
    patches = jnp.concatenate(cols, axis=0)                      # (K*K*Cin + 1, N*L)
    # TODO(synk): for large H*W, build the (KKC, Lt) patch tile in VMEM inside the kernel
    # (row-band grid + K*K shifted matmuls) instead of materializing the 9x im2col in HBM.

    # --- weights: (Cin, dim_out, K, K) -> equivalent-conv matrix rows, bias as last col ---
    def to_mat(w):
        wf = jnp.flip(w, axis=(2, 3))                            # flip taps (transpose conv)
        return jnp.transpose(wf, (1, 2, 3, 0)).reshape(dim_out, K * K * Cin)

    w_mat = jnp.concatenate([to_mat(w1), to_mat(w2)], axis=0)    # (2*dim_out, K*K*Cin)
    b_col = jnp.concatenate([b1, b2])[:, None]                   # (2*dim_out, 1)
    w_mat = jnp.concatenate([w_mat, b_col], axis=1).astype(mxu_dtype)

    approx_sigmoid = (mxu_dtype != jnp.float32)
    out_pre = fused_conv_glu_gate(w_mat, patches, dim_out,
                                  out_dtype=out_dtype,
                                  approx_sigmoid=approx_sigmoid)  # (dim_out//2, N*L)

    # --- final PixelShuffle(2) of the already-gated output + batch un-fold (one permute) ---
    Cg = dim_out // 8
    z = out_pre.reshape(Cg, 2, 2, N, Ho, Wo)
    z = jnp.transpose(z, (3, 0, 4, 1, 5, 2)).reshape(N, Cg, 2 * Ho, 2 * Wo)
    return z


# ----------------------------------------------------------------------------
# Pure-JAX reference (NCHW, mirrors the PyTorch module)
# ----------------------------------------------------------------------------
def _ref_pixel_shuffle_nchw(x, r):
    N, C, H, W = x.shape
    c = C // (r * r)
    x = x.reshape(N, c, r, r, H, W)
    x = jnp.transpose(x, (0, 1, 4, 2, 5, 3))
    return x.reshape(N, c, H * r, W * r)


def _ref_branch(x, w, b, stride, padding):
    K = w.shape[2]
    w_eq = jnp.transpose(jnp.flip(w, axis=(2, 3)), (1, 0, 2, 3))   # OIHW
    y = lax.conv_general_dilated(
        x, w_eq, window_strides=(1, 1),
        padding=[(K - 1 - padding, K - 1 - padding)] * 2,
        lhs_dilation=(stride, stride),
        dimension_numbers=("NCHW", "OIHW", "NCHW"),
        precision=lax.Precision.HIGHEST)
    y = y + b[None, :, None, None]
    y = _ref_pixel_shuffle_nchw(y, 2)
    c = y.shape[1] // 2
    return y[:, :c] * jax.nn.sigmoid(y[:, c:])


def reference_forward(x, w1, b1, w2, b2, stride, padding):
    g1 = _ref_branch(x, w1, b1, stride, padding)
    g2 = _ref_branch(x, w2, b2, stride, padding)
    return g1 * jax.nn.sigmoid(g2)


# ----------------------------------------------------------------------------
if __name__ == "__main__":
    # UpSampleBlock(dim_in=4, dim_out=16, kernel_size=3, stride=1, padding=1, bias=False)
    dim_in, dim_out, K, stride, padding = 4, 16, 3, 1, 1
    N, H, W = 2, 16, 16

    key = jax.random.PRNGKey(0)
    kw1, kw2, kx = jax.random.split(key, 3)
    w1 = jax.random.normal(kw1, (dim_in, dim_out, K, K), jnp.float32) * 0.1
    w2 = jax.random.normal(kw2, (dim_in, dim_out, K, K), jnp.float32) * 0.1
    b1 = jnp.zeros((dim_out,), jnp.float32)   # bias=False -> zeros
    b2 = jnp.zeros((dim_out,), jnp.float32)
    x = jax.random.normal(kx, (N, dim_in, H, W), jnp.float32)

    fwd_bf16 = jax.jit(functools.partial(upsample_block_forward, stride=stride,
                                         padding=padding, mxu_dtype=jnp.bfloat16))
    fwd_f32 = jax.jit(functools.partial(upsample_block_forward, stride=stride,
                                        padding=padding, mxu_dtype=jnp.float32))

    out = jax.block_until_ready(fwd_bf16(x, w1, b1, w2, b2))       # perf path (bf16 MXU)
    out_f32 = jax.block_until_ready(fwd_f32(x, w1, b1, w2, b2))    # exactness check path
    ref = jax.block_until_ready(reference_forward(x, w1, b1, w2, b2, stride, padding))

    assert out.shape == ref.shape == (N, dim_out // 8, 2 * H, 2 * W), out.shape
    err_f32 = float(jnp.max(jnp.abs(out_f32 - ref)))
    err_bf16 = float(jnp.max(jnp.abs(out - ref)))
    assert jnp.allclose(out_f32, ref, rtol=2e-3, atol=2e-3), \
        f"f32 path mismatch: max abs err {err_f32}"
    assert jnp.allclose(out, ref, rtol=5e-2, atol=5e-2), \
        f"bf16 path mismatch: max abs err {err_bf16}"

    print("KERNEL_OK")
</pallas_src>

<mosaic_0001>
module attributes {stable_mosaic.version = 11 : i64} {
  func.func @kernel(%arg0: i32, %arg1: memref<32x37xbf16, #tpu.memory_space<vmem>>, %arg2: memref<37x256xbf16, #tpu.memory_space<vmem>>, %arg3: memref<8x256xf32, #tpu.memory_space<vmem>>) attributes {dimension_semantics = [#tpu.dimension_semantics<parallel>], iteration_bounds = array<i64: 2>, scalar_prefetch = 0 : i64, scratch_operands = 0 : i64, tpu.core_type = #tpu.core_type<tc>, window_params = [{pipeline_mode = #tpu.pipeline_mode<synchronous>, transform_indices = @transform_0, window_bounds = array<i64: 32, 37>}, {transform_indices = @transform_1, window_bounds = array<i64: 37, 256>}, {transform_indices = @transform_2, window_bounds = array<i64: 8, 256>}]} {
    %c0 = arith.constant 0 : index
    %c0_0 = arith.constant 0 : index
    %0 = vector.load %arg1[%c0, %c0_0] : memref<32x37xbf16, #tpu.memory_space<vmem>>, vector<32x37xbf16>
    %c0_1 = arith.constant 0 : index
    %c0_2 = arith.constant 0 : index
    %1 = vector.load %arg2[%c0_1, %c0_2] : memref<37x256xbf16, #tpu.memory_space<vmem>>, vector<37x256xbf16>
    %cst = arith.constant dense<0.000000e+00> : vector<32x256xf32>
    %2 = tpu.matmul %0, %1, %cst {dimension_numbers = #tpu.dot_dimension_numbers<[1], [0], [0], [1], [0, 0, 1, 1], [], []>} : vector<32x37xbf16>, vector<37x256xbf16>, vector<32x256xf32> -> vector<32x256xf32>
    %3 = vector.extract_strided_slice %2 {offsets = [0, 0], sizes = [8, 256], strides = [1, 1]} : vector<32x256xf32> to vector<8x256xf32>
    %4 = vector.extract_strided_slice %2 {offsets = [8, 0], sizes = [8, 256], strides = [1, 1]} : vector<32x256xf32> to vector<8x256xf32>
    %cst_3 = arith.constant 0.000000e+00 : f32
    %5 = vector.broadcast %cst_3 : f32 to vector<8x256xf32>
    %6 = arith.subf %5, %4 : vector<8x256xf32>
    %7 = math.exp %6 : vector<8x256xf32>
    %cst_4 = arith.constant 1.000000e+00 : f32
    %8 = vector.broadcast %cst_4 : f32 to vector<8x256xf32>
    %9 = arith.addf %8, %7 : vector<8x256xf32>
    %10 = tpu.reciprocal %9 {approx = true} : vector<8x256xf32> -> vector<8x256xf32>
    %11 = arith.mulf %3, %10 : vector<8x256xf32>
    %12 = vector.extract_strided_slice %2 {offsets = [16, 0], sizes = [8, 256], strides = [1, 1]} : vector<32x256xf32> to vector<8x256xf32>
    %13 = vector.extract_strided_slice %2 {offsets = [24, 0], sizes = [8, 256], strides = [1, 1]} : vector<32x256xf32> to vector<8x256xf32>
    %cst_5 = arith.constant 0.000000e+00 : f32
    %14 = vector.broadcast %cst_5 : f32 to vector<8x256xf32>
    %15 = arith.subf %14, %13 : vector<8x256xf32>
    %16 = math.exp %15 : vector<8x256xf32>
    %cst_6 = arith.constant 1.000000e+00 : f32
    %17 = vector.broadcast %cst_6 : f32 to vector<8x256xf32>
    %18 = arith.addf %17, %16 : vector<8x256xf32>
    %19 = tpu.reciprocal %18 {approx = true} : vector<8x256xf32> -> vector<8x256xf32>
    %20 = arith.mulf %12, %19 : vector<8x256xf32>
    %cst_7 = arith.constant 0.000000e+00 : f32
    %21 = vector.broadcast %cst_7 : f32 to vector<8x256xf32>
    %22 = arith.subf %21, %20 : vector<8x256xf32>
    %23 = math.exp %22 : vector<8x256xf32>
    %cst_8 = arith.constant 1.000000e+00 : f32
    %24 = vector.broadcast %cst_8 : f32 to vector<8x256xf32>
    %25 = arith.addf %24, %23 : vector<8x256xf32>
    %26 = tpu.reciprocal %25 {approx = true} : vector<8x256xf32> -> vector<8x256xf32>
    %27 = arith.mulf %11, %26 : vector<8x256xf32>
    %c0_9 = arith.constant 0 : index
    %c0_10 = arith.constant 0 : index
    %28 = vector.load %arg3[%c0_9, %c0_10] : memref<8x256xf32, #tpu.memory_space<vmem>>, vector<8x256xf32>
    tpu.vector_store %arg3[%c0_9, %c0_10], %27 {strides = array<i32>} : memref<8x256xf32, #tpu.memory_space<vmem>>, vector<8x256xf32>,
    return
  }
  func.func @transform_0(%arg0: i32) -> (i32, i32) {
    %c0_i32 = arith.constant 0 : i32
    %c0_i32_0 = arith.constant 0 : i32
    %c0_i32_1 = arith.constant 0 : i32
    return %c0_i32, %c0_i32_0 : i32, i32
  }
  func.func @transform_1(%arg0: i32) -> (i32, i32) {
    %c0_i32 = arith.constant 0 : i32
    %c0_i32_0 = arith.constant 0 : i32
    return %c0_i32, %arg0 : i32, i32
  }
  func.func @transform_2(%arg0: i32) -> (i32, i32) {
    %c0_i32 = arith.constant 0 : i32
    %c0_i32_0 = arith.constant 0 : i32
    return %c0_i32, %arg0 : i32, i32
  }
}

</mosaic_0001>

<llo_original>
// kernel: upsample_block_forward.1
$region0: #{upsample_block_forward.1}
  #allocation0 [shape = 'u32[]', space=smem, size = 0x4, offset = 0x4, fixed_abs, tag = 'smem constant byte address 0x4 - core index']
  #allocation1 [shape = 'u32[144,128]{1,0:T(1,128)}', space=vmem, size = 0x12000, scoped, tag = 'internal scratch']
  %s0 = inlined_call_operand.vmem [shape: bf16[32,37], index: 0, kind: input, shape index: {}]
  %s1 = inlined_call_operand.vmem [shape: bf16[37,512], index: 1, kind: input, shape index: {}]
  %s2 = inlined_call_operand.vmem [shape: f32[8,512], index: 2, kind: output, shape index: {}]
  %s3 = sld [smem:[#allocation0]]
  $region79: #{upsample_block_forward.1} parent=0
    _
  %s5 = ssub.s32 1, %s3
  %s6 = scalar_select 0, %s5, %s3
  $region1: #{upsample_block_forward.1} parent=0
    #allocation2 [shape = 'u8[40960]{0}', space=vmem, size = 0xa000, scoped, tag = 'input window, operand 1']
    loop: start=0, step=1, limit=4
    $region2: #{upsample_block_forward.1} parent=1 // loop_pre_header
      _
    $region3: #{upsample_block_forward.1} parent=1 // loop_header
      %s8 = sphi 0, %s12
      %p9 = scmp.ge.s32.totalorder %s8, 4
      %s16 = sphi 0, %s16
      %s18 = sphi 0, %s16
      %s19 = sphi 0, %s18
      %s33 = sphi 0, %s19
      %s39 = sphi 0, %s41
      %s42 = sphi 0, %s39
      %s43 = sphi 0, %s42
      %s59 = sphi 0, %s43
      %s65 = sphi 0, %s67
      %s68 = sphi 0, %s65
      %s69 = sphi 0, %s68
      %s85 = sphi 0, %s69
    $region4: #{upsample_block_forward.1} parent=1 // loop_header_branch
      %11 = sbr.rel (%p9) target = $region8
    $region5: #{upsample_block_forward.1} parent=1 // loop_body
      %s13 = ssub.s32 %s8, 1
      %s14 = ssub.s32 %s8, 2
      %s15 = sadd.s32 %s8, 1
      %s17 = sadd.s32 %s16, 1
      %p20 = scmp.eq.s32.totalorder %s8, 1
      %p21 = scmp.ne.s32.totalorder %s16, %s18
      %p22 = scmp.eq.s32.totalorder %s8, 0
      %p23 = por %p21, %p22
      %p24 = scmp.ne.s32.totalorder %s16, %s18
      %p25 = scmp.eq.s32.totalorder %s13, 1
      %p26 = por %p24, %p25
      %p27 = scmp.ne.s32.totalorder %s18, %s19
      %p28 = scmp.eq.s32.totalorder %s13, 0
      %p29 = por %p27, %p28
      %p30 = scmp.ne.s32.totalorder %s18, %s19
      %p31 = scmp.eq.s32.totalorder %s14, 1
      %p32 = por %p30, %p31
      %p34 = scmp.ne.s32.totalorder %s19, %s33
      %p35 = scmp.eq.s32.totalorder %s14, 0
      %p36 = por %p34, %p35
      %s37 = ssub.s32 %s8, %s15
      %p38 = scmp.eq.s32.totalorder %s37, 0
      %s40 = sadd.s32 %s39, 1
      %s41 = scalar_select %p38, %s39, %s40
      %p44 = pneg %p38
      %p45 = scmp.eq.s32.totalorder %s8, 1
      %p46 = por %p44, %p45
      %p47 = scmp.ne.s32.totalorder %s39, %s42
      %p48 = scmp.eq.s32.totalorder %s8, 0
      %p49 = por %p47, %p48
      %p50 = scmp.ne.s32.totalorder %s39, %s42
      %p51 = scmp.eq.s32.totalorder %s13, 1
      %p52 = por %p50, %p51
      %p53 = scmp.ne.s32.totalorder %s42, %s43
      %p54 = scmp.eq.s32.totalorder %s13, 0
      %p55 = por %p53, %p54
      %p56 = scmp.ne.s32.totalorder %s42, %s43
      %p57 = scmp.eq.s32.totalorder %s14, 1
      %p58 = por %p56, %p57
      %p60 = scmp.ne.s32.totalorder %s43, %s59
      %p61 = scmp.eq.s32.totalorder %s14, 0
      %p62 = por %p60, %p61
      %s63 = ssub.s32 %s8, %s15
      %p64 = scmp.eq.s32.totalorder %s63, 0
      %s66 = sadd.s32 %s65, 1
      %s67 = scalar_select %p64, %s65, %s66
      %p70 = pneg %p64
      %p71 = scmp.eq.s32.totalorder %s8, 1
      %p72 = por %p70, %p71
      %p73 = scmp.ne.s32.totalorder %s65, %s68
      %p74 = scmp.eq.s32.totalorder %s8, 0
      %p75 = por %p73, %p74
      %p76 = scmp.ne.s32.totalorder %s65, %s68
      %p77 = scmp.eq.s32.totalorder %s13, 1
      %p78 = por %p76, %p77
      %p79 = scmp.ne.s32.totalorder %s68, %s69
      %p80 = scmp.eq.s32.totalorder %s13, 0
      %p81 = por %p79, %p80
      %p82 = scmp.ne.s32.totalorder %s68, %s69
      %p83 = scmp.eq.s32.totalorder %s14, 1
      %p84 = por %p82, %p83
      %p86 = scmp.ne.s32.totalorder %s69, %s85
      %p87 = scmp.eq.s32.totalorder %s14, 0
      %p88 = por %p86, %p87
      %p89 = scmp.le.s32.totalorder 1, %s8
      %p90 = scmp.lt.s32.totalorder %s8, 3
      %p91 = pnand %p89, %p90
      %p92 = pneg %p91
      // Predicated region
      $region9: #{upsample_block_forward.1} parent=5 // pred_check
        _
      $region10: #{upsample_block_forward.1} parent=5 // pred_check_branch
        %94 = sbr.rel (%p91) target = $region12
      $region11: #{upsample_block_forward.1} parent=5 // pred_region
        %s95 = ssub.s32 %s8, 1
        // Predicated region
        $region13: #{upsample_block_forward.1} parent=11 // pred_check
          %p96 = pneg %p29
        $region14: #{upsample_block_forward.1} parent=11 // pred_check_branch
          %98 = sbr.rel (%p96) target = $region16
        $region15: #{upsample_block_forward.1} parent=11 // pred_region
          _
        $region16: #{upsample_block_forward.1} parent=11 // pred_fallthru
          _
      $region12: #{upsample_block_forward.1} parent=5 // pred_fallthru
        _
      %p99 = scmp.lt.s32.totalorder %s8, 2
      // Predicated region
      $region17: #{upsample_block_forward.1} parent=5 // pred_check
        %p100 = pneg %p99
      $region18: #{upsample_block_forward.1} parent=5 // pred_check_branch
        %102 = sbr.rel (%p100) target = $region20
      $region19: #{upsample_block_forward.1} parent=5 // pred_region
        // Predicated region
        $region21: #{upsample_block_forward.1} parent=19 // pred_check
          %p103 = pneg %p49
        $region22: #{upsample_block_forward.1} parent=19 // pred_check_branch
          %105 = sbr.rel (%p103) target = $region24
        $region23: #{upsample_block_forward.1} parent=19 // pred_region
          %s106 = sand.u32 %s39, 1
          %s107 = sand.u32 %s39, 1
          %s108 = smul.addr %s107, 40
          %s109 = scalar_lea.vmem [#allocation2], %s108
          %s110 = smul.u32 2, %s8
          %s111 = smul.addr %s110, 4
          %s112 = scalar_lea.vmem %s1, %s111
          // Predicated region
          $region25: #{upsample_block_forward.1} parent=23 // pred_check
            _
          $region26: #{upsample_block_forward.1} parent=23 // pred_check_branch
            %114 = sbr.rel (0) target = $region28
          $region27: #{upsample_block_forward.1} parent=23 // pred_region
            // Predicated region
            $region29: #{upsample_block_forward.1} parent=27 // pred_check
              _
            $region30: #{upsample_block_forward.1} parent=27 // pred_check_branch
              %116 = sbr.rel (0) target = $region32
            $region31: #{upsample_block_forward.1} parent=27 // pred_region
              // Predicated region
              $region44: #{upsample_block_forward.1} parent=31 // pred_check
                _
              $region45: #{upsample_block_forward.1} parent=31 // pred_check_branch
                %139 = sbr.rel (0) target = $region47
              $region46: #{upsample_block_forward.1} parent=31 // pred_region
                loop: start=0, step=1, limit=1
                $region48: #{upsample_block_forward.1} parent=46 // loop_pre_header
                  _
                $region49: #{upsample_block_forward.1} parent=46 // loop_header
                  %s141 = sphi 0, %s145
                  %p142 = scmp.ge.s32.totalorder %s141, 1
                  %s146 = sphi %s112, %s112
                  %s147 = sphi %s109, %s109
                $region50: #{upsample_block_forward.1} parent=46 // loop_header_branch
                  %144 = sbr.rel (%p142) target = $region54
                $region51: #{upsample_block_forward.1} parent=46 // loop_body
                  %v148 = vld [vmem:[%s146] sm:$0xff]
                  %149 = vst [vmem:[%s147] sm:$0xff] %v148
                  %v150 = vld [vmem:[%s146 + $0x10] sm:$0xff]
                  %151 = vst [vmem:[%s147 + $0x8] sm:$0xff] %v150
                  %v152 = vld [vmem:[%s146 + $0x20] sm:$0xff]
                  %153 = vst [vmem:[%s147 + $0x10] sm:$0xff] %v152
                  %v154 = vld [vmem:[%s146 + $0x30] sm:$0xff]
                  %155 = vst [vmem:[%s147 + $0x18] sm:$0xff] %v154
                  %v156 = vld [vmem:[%s146 + $0x40] sm:$0xff]
                  %157 = vst [vmem:[%s147 + $0x20] sm:$0xff] %v156
                $region52: #{upsample_block_forward.1} parent=46 // loop_footer
                  %s145 = sadd.s32 1, %s141
                $region53: #{upsample_block_forward.1} parent=46 // loop_footer_branch
                  %140 = sbr.rel target = $region49
                $region54: #{upsample_block_forward.1} parent=46 // loop_exit
                  _
              $region47: #{upsample_block_forward.1} parent=31 // pred_fallthru
                _
              // Predicated region
              $region55: #{upsample_block_forward.1} parent=31 // pred_check
                _
              $region56: #{upsample_block_forward.1} parent=31 // pred_check_branch
                %159 = sbr.rel target = $region58
              $region57: #{upsample_block_forward.1} parent=31 // pred_region
                _
              $region58: #{upsample_block_forward.1} parent=31 // pred_fallthru
                _
            $region32: #{upsample_block_forward.1} parent=27 // pred_fallthru
              _
            // Predicated region
            $region33: #{upsample_block_forward.1} parent=27 // pred_check
              _
            $region34: #{upsample_block_forward.1} parent=27 // pred_check_branch
              %118 = sbr.rel target = $region36
            $region35: #{upsample_block_forward.1} parent=27 // pred_region
              loop: start=0, step=1, limit=1
              $region37: #{upsample_block_forward.1} parent=35 // loop_pre_header
                _
              $region38: #{upsample_block_forward.1} parent=35 // loop_header
                %s121 = sphi 0, %s125
                %p122 = scmp.ge.s32.totalorder %s121, 1
                %s126 = sphi %s112, %s112
                %s127 = sphi %s109, %s109
              $region39: #{upsample_block_forward.1} parent=35 // loop_header_branch
                %124 = sbr.rel (%p122) target = $region43
              $region40: #{upsample_block_forward.1} parent=35 // loop_body
                %v128 = vld [vmem:[%s126] sm:$0xff]
                %129 = vst [vmem:[%s127] sm:$0xff] %v128
                %v130 = vld [vmem:[%s126 + $0x10] sm:$0xff]
                %131 = vst [vmem:[%s127 + $0x8] sm:$0xff] %v130
                %v132 = vld [vmem:[%s126 + $0x20] sm:$0xff]
                %133 = vst [vmem:[%s127 + $0x10] sm:$0xff] %v132
                %v134 = vld [vmem:[%s126 + $0x30] sm:$0xff]
                %135 = vst [vmem:[%s127 + $0x18] sm:$0xff] %v134
                %v136 = vld [vmem:[%s126 + $0x40] sm:$0xff]
                %137 = vst [vmem:[%s127 + $0x20] sm:$0xff] %v136
              $region41: #{upsample_block_forward.1} parent=35 // loop_footer
                %s125 = sadd.s32 1, %s121
              $region42: #{upsample_block_forward.1} parent=35 // loop_footer_branch
                %120 = sbr.rel target = $region38
              $region43: #{upsample_block_forward.1} parent=35 // loop_exit
                _
            $region36: #{upsample_block_forward.1} parent=27 // pred_fallthru
              _
          $region28: #{upsample_block_forward.1} parent=23 // pred_fallthru
            _
          %160 = vnop
        $region24: #{upsample_block_forward.1} parent=19 // pred_fallthru
          _
      $region20: #{upsample_block_forward.1} parent=5 // pred_fallthru
        _
      %p161 = scmp.le.s32.totalorder 1, %s8
      %p162 = scmp.lt.s32.totalorder %s8, 3
      %p163 = pnand %p161, %p162
      %p164 = pneg %p163
      // Predicated region
      $region59: #{upsample_block_forward.1} parent=5 // pred_check
        _
      $region60: #{upsample_block_forward.1} parent=5 // pred_check_branch
        %166 = sbr.rel (%p163) target = $region62
      $region61: #{upsample_block_forward.1} parent=5 // pred_region
        %s167 = ssub.s32 %s8, 1
        %s168 = sand.u32 %s42, 1
        %s169 = sand.u32 %s42, 1
        %s170 = smul.addr %s169, 40
        %s171 = scalar_lea.vmem [#allocation2], %s170
        // Predicated region
        $region63: #{upsample_block_forward.1} parent=61 // pred_check
          %p172 = pneg %p55
        $region64: #{upsample_block_forward.1} parent=61 // pred_check_branch
          %174 = sbr.rel (%p172) target = $region66
        $region65: #{upsample_block_forward.1} parent=61 // pred_region
          _
        $region66: #{upsample_block_forward.1} parent=61 // pred_fallthru
          _
        %p175 = pneg %p29
        %p176 = pneg %p26
        %s177 = sand.u32 %s42, 1
        %s178 = sand.u32 %s42, 1
        %s179 = smul.addr %s178, 40
        %s180 = scalar_lea.vmem [#allocation2], %s179
        %p181 = pneg %p55
        %p182 = pneg %p52
        %p183 = pneg %p81
        %p184 = pneg %p78
        %s185 = smul.u32 2, %s13
        %p186 = scmp.lt.s32.totalorder %s185, 3
        %s187 = scalar_select %p186, %s185, 3
        %s188 = smul.addr %s187, 8
        %s189 = scalar_lea.vmem %s2, %s188
        %s190 = smul.u32 2, %s13
        %s191 = smul.u32 2, %s13
        %p192 = scmp.lt.s32.totalorder %s191, 3
        %s193 = scalar_select %p192, %s191, 3
        %s194 = smul.addr %s193, 8
        %s195 = scalar_lea.vmem %s2, %s194
        %s196 = smul.u32 2, %s13
        %v198 = vld [vmem:[%s0] sm:$0xf]
        %v199 = vld [vmem:[%s0 + $0x4] sm:$0xf]
        %v200 = vld [vmem:[%s0 + $0x8] sm:$0xf]
        %v201 = vld [vmem:[%s0 + $0xc] sm:$0xf]
        %v202 = vld [vmem:[%s171] sm:$0xff]
        %v203 = vld [vmem:[%s171 + $0x8] sm:$0xff]
        %v204 = vld [vmem:[%s171 + $0x10] sm:$0xff]
        %v205 = vld [vmem:[%s171 + $0x18] sm:$0xff]
        %v206 = vld [vmem:[%s171 + $0x20] sm:$0x77]
        %v211 = vunpack.c.l.b16 %v198
        %v212 = vunpack.c.l.b16 %v199
        %v213 = vunpack.c.l.b16 %v200
        %v214 = vunpack.c.l.b16 %v201
        %v215 = vpack.c.b16 %v212, %v211
        %v216 = vpack.c.b16 %v214, %v213
        %v222 = vunpack.c.l.b16 %v202
        %v223 = vunpack.c.h.b16 %v202
        %v224 = vunpack.c.l.b16 %v203
        %v225 = vunpack.c.h.b16 %v203
        %v226 = vunpack.c.l.b16 %v204
        %v227 = vunpack.c.h.b16 %v204
        %v228 = vunpack.c.l.b16 %v205
        %v229 = vunpack.c.h.b16 %v205
        %v230 = vunpack.c.l.b16 %v206
        %v231 = vunpack.c.h.b16 %v206
        %v232 = vpack.c.b16 %v224, %v222
        %v233 = vpack.c.b16 %v225, %v223
        %v234 = vpack.c.b16 %v228, %v226
        %v235 = vpack.c.b16 %v229, %v227
        %v236 = vpack.c.b16 %v230, %v230
        %v237 = vpack.c.b16 %v231, %v231
        %vm242 = vcmask 302080
        %v244 = vsel %vm242, %v215, 0
        %v247 = vsel %vm242, %v216, 0
        %vm249 = vcmask 1041408
        %vm250 = vcmask 1042432
        %v251 = vsel %vm249, 4294967295, 65535
        %v252 = vsel %vm250, %v251, 0
        %v254 = vand.u32 %v236, %v252
        %v257 = vand.u32 %v237, %v252
        %259 = vmatprep.subr.bf16.mxu0 %v233
        %260 = vmatpush1.bf16.msra.mxu0 %v232
        %261 = vmatprep.subr.bf16.mxu0 %v235
        %262 = vmatpush1.bf16.msra.mxu0 %v234
        %263 = vmatprep.subr.bf16.mxu0 %v257
        %264 = vmatpush1.bf16.msra.mxu0 %v254
        %265 = vmatprep.subr.bf16.mxu0 0
        %266 = vmatpush1.bf16.msra.mxu0 0
        %267 = vmatprep.subr.bf16.mxu0 0
        %268 = vmatpush1.bf16.msra.mxu0 0
        %269 = vmatprep.subr.bf16.mxu0 0
        %270 = vmatpush1.bf16.msra.mxu0 0
        %271 = vmatprep.subr.bf16.mxu0 0
        %272 = vmatpush1.bf16.msra.mxu0 0
        %273 = vmatprep.subr.bf16.mxu0 0
        %274 = vmatpush1.bf16.msra.mxu0 0
        %275 = vmatprep.subr.bf16.mxu0 0
        %276 = vmatpush1.bf16.msra.mxu0 0
        %277 = vmatprep.subr.bf16.mxu0 0
        %278 = vmatpush1.bf16.msra.mxu0 0
        %279 = vmatprep.subr.bf16.mxu0 0
        %280 = vmatpush1.bf16.msra.mxu0 0
        %281 = vmatprep.subr.bf16.mxu0 0
        %282 = vmatpush1.bf16.msra.mxu0 0
        %283 = vmatprep.subr.bf16.mxu0 0
        %284 = vmatpush1.bf16.msra.mxu0 0
        %285 = vmatprep.subr.bf16.mxu0 0
        %286 = vmatpush1.bf16.msra.mxu0 0
        %287 = vmatprep.subr.bf16.mxu0 0
        %288 = vmatpush1.bf16.msra.mxu0 0
        %289 = vmatprep.subr.bf16.mxu0 0
        %290 = vmatpush1.bf16.msra.mxu0 0
        %291 = vmatprep.mubr.bf16.mxu0 0
        %292 = vmatmul.mubr.bf16.gmra.mrb[0].mxu0 %v244
        %v293 = vpop.f32.mrb[0].mxu0
        %v294 = vadd.f32 0.0, %v293
        %v295 = vpop.f32.mrb[0].mxu0
        %v296 = vadd.f32 0.0, %v295
        %v297 = vpop.f32.mrb[0].mxu0
        %v298 = vadd.f32 0.0, %v297
        %v299 = vpop.f32.mrb[0].mxu0
        %v300 = vadd.f32 0.0, %v299
        %301 = vmatprep.mubr.bf16.mxu0 0
        %302 = vmatmul.mubr.bf16.gmra.mrb[0].mxu0 %v247
        %v303 = vpop.f32.mrb[0].mxu0
        %v304 = vadd.f32 0.0, %v303
        %v305 = vpop.f32.mrb[0].mxu0
        %v306 = vadd.f32 0.0, %v305
        %v307 = vpop.f32.mrb[0].mxu0
        %v308 = vadd.f32 0.0, %v307
        %v309 = vpop.f32.mrb[0].mxu0
        %v310 = vadd.f32 0.0, %v309
        %311 = vdwg.mxu0
        %v312 = vsub.f32 0.0, %v298
        %v313 = vsub.f32 0.0, %v300
        %v314 = vmul.f32 %v312, 1.442695
        %v315 = vpow.pop %v314
        %v316 = vmul.f32 %v313, 1.442695
        %v317 = vpow.pop %v316
        %v318 = vadd.f32 %v315, 1.0
        %v319 = vadd.f32 %v317, 1.0
        %v320 = vrcp.pop %v318
        %v321 = vrcp.pop %v319
        %v322 = vmul.f32 %v294, %v320
        %v323 = vmul.f32 %v296, %v321
        %v324 = vsub.f32 0.0, %v308
        %v325 = vsub.f32 0.0, %v310
        %v326 = vmul.f32 %v324, 1.442695
        %v327 = vpow.pop %v326
        %v328 = vmul.f32 %v325, 1.442695
        %v329 = vpow.pop %v328
        %v330 = vadd.f32 %v327, 1.0
        %v331 = vadd.f32 %v329, 1.0
        %v332 = vrcp.pop %v330
        %v333 = vrcp.pop %v331
        %v334 = vmul.f32 %v304, %v332
        %v335 = vmul.f32 %v306, %v333
        %v336 = vsub.f32 0.0, %v334
        %v337 = vsub.f32 0.0, %v335
        %v338 = vmul.f32 %v336, 1.442695
        %v339 = vpow.pop %v338
        %v340 = vmul.f32 %v337, 1.442695
        %v341 = vpow.pop %v340
        %v342 = vadd.f32 %v339, 1.0
        %v343 = vadd.f32 %v341, 1.0
        %v344 = vrcp.pop %v342
        %v345 = vrcp.pop %v343
        %v346 = vmul.f32 %v322, %v344
        %v347 = vmul.f32 %v323, %v345
        %348 = vst [vmem:[%s195] sm:$0xff] %v346
        %349 = vst [vmem:[%s195 + $0x8] sm:$0xff] %v347
        %s350 = smul.u32 2, %s13
        %p351 = scmp.lt.s32.totalorder %s350, 3
        %s352 = scalar_select %p351, %s350, 3
        %s353 = smul.addr %s352, 8
        %s354 = scalar_lea.vmem %s2, %s353
        // Predicated region
        $region67: #{upsample_block_forward.1} parent=61 // pred_check
          %p355 = pneg %p78
        $region68: #{upsample_block_forward.1} parent=61 // pred_check_branch
          %357 = sbr.rel (%p355) target = $region70
        $region69: #{upsample_block_forward.1} parent=61 // pred_region
          %s358 = smul.u32 2, %s13
        $region70: #{upsample_block_forward.1} parent=61 // pred_fallthru
          _
      $region62: #{upsample_block_forward.1} parent=5 // pred_fallthru
        _
      %p359 = scmp.le.s32.totalorder 2, %s8
      // Predicated region
      $region71: #{upsample_block_forward.1} parent=5 // pred_check
        %p360 = pneg %p359
      $region72: #{upsample_block_forward.1} parent=5 // pred_check_branch
        %362 = sbr.rel (%p360) target = $region74
      $region73: #{upsample_block_forward.1} parent=5 // pred_region
        %s363 = ssub.s32 %s8, 2
        // Predicated region
        $region75: #{upsample_block_forward.1} parent=73 // pred_check
          %p364 = pneg %p84
        $region76: #{upsample_block_forward.1} parent=73 // pred_check_branch
          %366 = sbr.rel (%p364) target = $region78
        $region77: #{upsample_block_forward.1} parent=73 // pred_region
          %s367 = smul.u32 2, %s14
          %p368 = scmp.lt.s32.totalorder %s367, 3
          %s369 = scalar_select %p368, %s367, 3
          %s370 = smul.addr %s369, 8
          %s371 = scalar_lea.vmem %s2, %s370
        $region78: #{upsample_block_forward.1} parent=73 // pred_fallthru
          _
      $region74: #{upsample_block_forward.1} parent=5 // pred_fallthru
        _
    $region6: #{upsample_block_forward.1} parent=1 // loop_footer
      %s12 = sadd.s32 1, %s8
    $region7: #{upsample_block_forward.1} parent=1 // loop_footer_branch
      %7 = sbr.rel target = $region3
    $region8: #{upsample_block_forward.1} parent=1 // loop_exit
      _

</llo_original>
